<compile_context>
chip_gen: v7x
topology: tpu7x:2x2x1
jax: 0.10.0
libtpu: 0.0.40
codegen_flags: <defaults>
</compile_context>

<pallas_src>
import jax
import jax.numpy as jnp
from jax.experimental import pallas as pl
from jax.experimental.pallas import tpu as pltpu

_MIB = 1024 * 1024


def _cos_kernel(x_ref, o_ref):
    # Whole-tile elementwise cosine (VPU range-reduction + polynomial).
    o_ref[...] = jnp.cos(x_ref[...])


def _vmem_capacity_bytes() -> int:
    """Trace-time VMEM capacity query with a conservative (v7x-sized) fallback."""
    try:
        return int(pltpu.get_tpu_info().vmem_capacity_bytes)
    except Exception:
        return 64 * _MIB


def _plan_layout(total: int):
    """Pick a lane-dense (rows, lanes, padded_total) layout for a flat tensor."""
    for lanes in (1024, 512, 256, 128):
        if total % lanes == 0:
            return total // lanes, lanes, total
    # No exact factorization: pad up to the next lane multiple (sliced off later).
    lanes = 1024 if total >= 1024 else 128
    padded = -(-total // lanes) * lanes
    return padded // lanes, lanes, padded


def cos_pallas(x: jax.Array) -> jax.Array:
    """cos(x) for a rank-4 f32 array, computed in a Pallas TPU kernel."""
    assert x.ndim == 4, "expected rank-4 input (N, C, H, W)"
    orig_shape = x.shape
    total = x.size
    itemsize = jnp.dtype(x.dtype).itemsize

    rows, lanes, padded_total = _plan_layout(total)

    x_flat = x.reshape(-1)
    if padded_total != total:
        x_flat = jnp.pad(x_flat, (0, padded_total - total))
    x2d = x_flat.reshape(rows, lanes)

    # ---- generation-specific block / VMEM sizing -------------------------
    vmem_cap = _vmem_capacity_bytes()
    if vmem_cap >= 100 * _MIB:
        # v5e / v6e: 128 MiB physical VMEM -> large streaming blocks.
        target_block_bytes = 14 * _MIB
        vmem_limit = 96 * _MIB
    else:
        # v7x: 64 MiB VMEM per TC -> cap blocks so in+out double-buffering fits.
        target_block_bytes = 8 * _MIB
        vmem_limit = 40 * _MIB

    row_bytes = lanes * itemsize
    target_rows = max(1, target_block_bytes // row_bytes)

    if rows <= target_rows:
        if rows >= 16 and rows * row_bytes > 2 * _MIB:
            # Whole tensor fits in one block, but split into >=2 row tiles so a
            # multi-TC chip (v7x) can shard the "parallel" grid axis.
            half = (rows + 1) // 2
            tile_rows = -(-half // 8) * 8          # round up to a multiple of 8
            tile_rows = min(tile_rows, rows)
        else:
            tile_rows = rows                        # tiny tensor: single block
    else:
        tile_rows = max(8, (target_rows // 8) * 8)  # byte-sized tile, mult. of 8

    grid = (pl.cdiv(rows, tile_rows),)

    cost = pl.CostEstimate(
        flops=25 * padded_total,        # cos lowers to a VPU polynomial, not EUP
        transcendentals=0,
        bytes_accessed=2 * padded_total * itemsize,
    )

    out2d = pl.pallas_call(
        _cos_kernel,
        out_shape=jax.ShapeDtypeStruct((rows, lanes), x.dtype),
        grid_spec=pl.GridSpec(
            grid=grid,
            in_specs=[pl.BlockSpec((tile_rows, lanes), lambda i: (i, 0))],
            out_specs=pl.BlockSpec((tile_rows, lanes), lambda i: (i, 0)),
        ),
        compiler_params=pltpu.CompilerParams(
            dimension_semantics=("parallel",),
            vmem_limit_bytes=vmem_limit,
        ),
        cost_estimate=cost,
    )(x2d)

    out_flat = out2d.reshape(-1)
    if padded_total != total:
        out_flat = out_flat[:total]
    return out_flat.reshape(orig_shape)


if __name__ == "__main__":
    key = jax.random.PRNGKey(0)
    x = jax.random.normal(key, (2, 4, 16, 16), dtype=jnp.float32)

    y = cos_pallas(x)
    jax.block_until_ready(y)

    # correctness check against plain JAX
    ref = jnp.cos(x)
    assert y.shape == x.shape and y.dtype == x.dtype
    assert jnp.allclose(y, ref, atol=1e-5, rtol=1e-5), "mismatch vs jnp.cos"

    print("KERNEL_OK")
</pallas_src>

<mosaic_0001>
module attributes {stable_mosaic.version = 11 : i64} {
  func.func @_cos_kernel(%arg0: i32, %arg1: memref<2x1024xf32, #tpu.memory_space<vmem>>, %arg2: memref<2x1024xf32, #tpu.memory_space<vmem>>) attributes {dimension_semantics = [#tpu.dimension_semantics<parallel>], iteration_bounds = array<i64: 1>, scalar_prefetch = 0 : i64, scratch_operands = 0 : i64, tpu.core_type = #tpu.core_type<tc>, window_params = [{transform_indices = @transform_0, window_bounds = array<i64: 2, 1024>}, {transform_indices = @transform_1, window_bounds = array<i64: 2, 1024>}]} {
    %c0 = arith.constant 0 : index
    %c0_0 = arith.constant 0 : index
    %0 = vector.load %arg1[%c0, %c0_0] : memref<2x1024xf32, #tpu.memory_space<vmem>>, vector<2x1024xf32>
    %1 = math.cos %0 : vector<2x1024xf32>
    %c0_1 = arith.constant 0 : index
    %c0_2 = arith.constant 0 : index
    %2 = vector.load %arg2[%c0_1, %c0_2] : memref<2x1024xf32, #tpu.memory_space<vmem>>, vector<2x1024xf32>
    tpu.vector_store %arg2[%c0_1, %c0_2], %1 {strides = array<i32>} : memref<2x1024xf32, #tpu.memory_space<vmem>>, vector<2x1024xf32>,
    return
  }
  func.func @transform_0(%arg0: i32) -> (i32, i32) {
    %c0_i32 = arith.constant 0 : i32
    %c0_i32_0 = arith.constant 0 : i32
    return %arg0, %c0_i32 : i32, i32
  }
  func.func @transform_1(%arg0: i32) -> (i32, i32) {
    %c0_i32 = arith.constant 0 : i32
    %c0_i32_0 = arith.constant 0 : i32
    return %arg0, %c0_i32 : i32, i32
  }
}

</mosaic_0001>

<llo_original>
// kernel: tpu_custom_call.1
$region0: #{tpu_custom_call.1}
  #allocation0 [shape = 'u32[]', space=smem, size = 0x4, offset = 0x4, fixed_abs, tag = 'smem constant byte address 0x4 - core index']
  #allocation1 [shape = 'u32[144,128]{1,0:T(1,128)}', space=vmem, size = 0x12000, scoped, tag = 'internal scratch']
  %s0 = inlined_call_operand.hbm [shape: f32[2,1024], index: 0, kind: input, shape index: {}]
  %s1 = inlined_call_operand.hbm [shape: f32[2,1024], index: 1, kind: output, shape index: {}]
  %s2 = sld [smem:[#allocation0]]
  $region18: #{tpu_custom_call.1} parent=0
    _
  %s4 = ssub.s32 1, %s2
  %s5 = scalar_select 0, %s4, %s2
  $region1: #{tpu_custom_call.1} parent=0
    #allocation2 [shape = 'u8[8192]{0}', space=vmem, size = 0x2000, scoped, tag = 'input window, operand 0, single buffered']
    #allocation3 [shape = 's32[1]{0}', space=sflag, size = 0x4, scoped, tag = 'scoped memory for tpu_custom_call.1']
    #allocation4 [shape = 's32[1]{0}', space=sflag, size = 0x4, scoped, tag = 'scoped memory for tpu_custom_call.1']
    #allocation5 [shape = 'u8[8192]{0}', space=vmem, size = 0x2000, scoped, tag = 'output window, operand 0, single buffered']
    %6 = vsyncpa [#allocation3], 0
    %7 = vsyncpa [#allocation4], 0
    // Predicated region
    $region2: #{tpu_custom_call.1} parent=1 // pred_check
      _
    $region3: #{tpu_custom_call.1} parent=1 // pred_check_branch
      %9 = sbr.rel (0) target = $region5
    $region4: #{tpu_custom_call.1} parent=1 // pred_region
      %s11 = ssub.s32 256, 256
      %12 = vsyncadd [#allocation3], %s11
      %s14 = sshll.u32 [#allocation2], 4
      %s15 = int_to_ptr.vmem [resolvable:$true] %s14
      %17 = dma.hbm_to_vmem [thread:$0]  %s0, 256, %s15, [#allocation3]
    $region5: #{tpu_custom_call.1} parent=1 // pred_fallthru
      _
    // Predicated region
    $region6: #{tpu_custom_call.1} parent=1 // pred_check
      _
    $region7: #{tpu_custom_call.1} parent=1 // pred_check_branch
      %19 = sbr.rel (0) target = $region9
    $region8: #{tpu_custom_call.1} parent=1 // pred_region
      %20 = dma.done [#allocation3], 256
    $region9: #{tpu_custom_call.1} parent=1 // pred_fallthru
      _
    %v21 = vld [vmem:[#allocation2] sm:$0xff]
    %v22 = vld [vmem:[#allocation2 + $0x8] sm:$0xff]
    %v23 = vand.u32 2147483647, %v21
    %vm24 = vcmp.le.f32.partialorder %v23, 0.7853982
    %vm25 = vcmp.lt.s32.totalorder %v21, 0
    %v26 = vand.u32 %v21, 2139095040
    %v27 = vshrl.u32 %v26, 23
    %v28 = vsub.s32 %v27, 127
    %v29 = vand.u32 2147483647, %v21
    %v30 = vand.u32 %v29, 8388607
    %v31 = vor.u32 %v30, 8388608
    %v32 = vsub.s32 0, %v31
    %v33 = vadd.s32 %v28, 1
    %vm34 = vcmp.gt.s32.totalorder %v33, 0
    %v35 = vsel %vm34, %v33, 0
    %v36 = vshrl.u32 %v35, 5
    %v37 = vand.u32 %v35, 31
    %v38 = vsub.s32 32, %v37
    %v39 = vshrl.u32 683565275, %v38
    %v40 = vshll.u32 683565275, %v37
    %v41 = vshrl.u32 2475754826, %v38
    %v42 = vor.u32 %v40, %v41
    %v43 = vshll.u32 2475754826, %v37
    %v44 = vshrl.u32 2131351028, %v38
    %v45 = vor.u32 %v43, %v44
    %v46 = vshll.u32 2131351028, %v37
    %v47 = vshrl.u32 2102212464, %v38
    %v48 = vor.u32 %v46, %v47
    %v49 = vshll.u32 2102212464, %v37
    %v50 = vshrl.u32 920167782, %v38
    %v51 = vor.u32 %v49, %v50
    %v52 = vshll.u32 920167782, %v37
    %v53 = vshrl.u32 1326507024, %v38
    %v54 = vor.u32 %v52, %v53
    %vm55 = vcmp.lt.s32.totalorder %v36, 1
    %vm56 = vcmp.lt.s32.totalorder %v36, 2
    %vm57 = vcmp.lt.s32.totalorder %v36, 3
    %vm58 = vcmp.lt.s32.totalorder %v36, 4
    %v59 = vsel %vm55, %v39, %v42
    %v60 = vsel %vm58, %v48, 2102212464
    %v61 = vsel %vm57, %v45, %v60
    %v62 = vsel %vm56, %v59, %v61
    %v63 = vsel %vm55, %v42, %v45
    %v64 = vsel %vm58, %v51, 920167782
    %v65 = vsel %vm57, %v48, %v64
    %v66 = vsel %vm56, %v63, %v65
    %v67 = vsel %vm55, %v45, %v48
    %v68 = vsel %vm58, %v54, 1326507024
    %v69 = vsel %vm57, %v51, %v68
    %v70 = vsel %vm56, %v67, %v69
    %v71 = vshll.u32 %v31, 8
    %v72 = vmul.u32.u64.compose %v71, %v70
    %v73 = vextract.low.u32 %v72
    %v74 = vextract.high.u32 %v72
    %v75 = vmul.u32.u64.compose %v71, %v66
    %v76 = vextract.low.u32 %v75
    %v77 = vextract.high.u32 %v75
    %v78 = vmul.u32 %v71, %v62
    %v79 = vadd.s32 %v74, %v76
    %vm80 = vc.u32 %v74, %v76
    %v81 = vadd.s32 %v77, 1
    %v82 = vsel %vm80, %v81, %v77
    %v83 = vadd.s32 %v78, %v82
    %v84 = vadd.s32 %v83, 536870912
    %v85 = vshrl.u32 %v84, 30
    %v86 = vshll.u32 %v85, 30
    %v87 = vsub.s32 %v83, %v86
    %vm88 = vcmp.lt.s32.totalorder %v87, 0
    %v89 = vsub.s32 0, %v87
    %v90 = vsel %vm88, %v89, %v87
    %v91 = vclz %v90
    %v92 = vsub.s32 %v91, 2
    %vm93 = vcmp.gt.s32.totalorder 0, %v92
    %v94 = vsel %vm93, 0, %v92
    %v95 = vsub.s32 32, %v94
    %v96 = vshll.u32 %v87, %v94
    %v97 = vshrl.u32 %v79, %v95
    %v98 = vor.u32 %v96, %v97
    %v99 = vsub.s32 4294967266, %v94
    %v100 = vadd.s32 %v99, 127
    %v101 = vshll.u32 %v100, 23
    %v102 = vor.u32 4788187, %v101
    %v103 = vand.u32 2147483647, %v102
    %v105 = vcvt.s32.f32 %v98
    %v106 = vmul.f32 %v105, %v103
    %v107 = vxor.u32 %v106, 2147483648
    %v108 = vsel %vm25, %v107, %v106
    %v109 = vsub.s32 4, %v85
    %v110 = vsel %vm25, %v109, %v85
    %v111 = vsel %vm24, %v21, %v108
    %v112 = vsel %vm24, 0, %v110
    %v113 = vcosq.f32.pop %v111
    %v114 = vsinq.f32.pop %v111
    %vm115 = vweird.f32 %v21
    %v116 = vand.u32 %v112, 3
    %vm117 = vcmp.lt.s32.totalorder %v116, 2
    %vm118 = vcmp.eq.s32.totalorder %v116, 0
    %v119 = vxor.u32 %v114, 2147483648
    %v120 = vsel %vm118, %v113, %v119
    %vm121 = vcmp.eq.s32.totalorder %v116, 2
    %v122 = vxor.u32 %v113, 2147483648
    %v123 = vsel %vm121, %v122, %v114
    %v124 = vsel %vm117, %v120, %v123
    %v125 = vsel %vm115, nan, %v124
    %v126 = vand.u32 2147483647, %v22
    %vm127 = vcmp.le.f32.partialorder %v126, 0.7853982
    %vm128 = vcmp.lt.s32.totalorder %v22, 0
    %v129 = vand.u32 %v22, 2139095040
    %v130 = vshrl.u32 %v129, 23
    %v131 = vsub.s32 %v130, 127
    %v132 = vand.u32 2147483647, %v22
    %v133 = vand.u32 %v132, 8388607
    %v134 = vor.u32 %v133, 8388608
    %v135 = vsub.s32 0, %v134
    %v136 = vadd.s32 %v131, 1
    %vm137 = vcmp.gt.s32.totalorder %v136, 0
    %v138 = vsel %vm137, %v136, 0
    %v139 = vshrl.u32 %v138, 5
    %v140 = vand.u32 %v138, 31
    %v141 = vsub.s32 32, %v140
    %v142 = vshrl.u32 683565275, %v141
    %v143 = vshll.u32 683565275, %v140
    %v144 = vshrl.u32 2475754826, %v141
    %v145 = vor.u32 %v143, %v144
    %v146 = vshll.u32 2475754826, %v140
    %v147 = vshrl.u32 2131351028, %v141
    %v148 = vor.u32 %v146, %v147
    %v149 = vshll.u32 2131351028, %v140
    %v150 = vshrl.u32 2102212464, %v141
    %v151 = vor.u32 %v149, %v150
    %v152 = vshll.u32 2102212464, %v140
    %v153 = vshrl.u32 920167782, %v141
    %v154 = vor.u32 %v152, %v153
    %v155 = vshll.u32 920167782, %v140
    %v156 = vshrl.u32 1326507024, %v141
    %v157 = vor.u32 %v155, %v156
    %vm158 = vcmp.lt.s32.totalorder %v139, 1
    %vm159 = vcmp.lt.s32.totalorder %v139, 2
    %vm160 = vcmp.lt.s32.totalorder %v139, 3
    %vm161 = vcmp.lt.s32.totalorder %v139, 4
    %v162 = vsel %vm158, %v142, %v145
    %v163 = vsel %vm161, %v151, 2102212464
    %v164 = vsel %vm160, %v148, %v163
    %v165 = vsel %vm159, %v162, %v164
    %v166 = vsel %vm158, %v145, %v148
    %v167 = vsel %vm161, %v154, 920167782
    %v168 = vsel %vm160, %v151, %v167
    %v169 = vsel %vm159, %v166, %v168
    %v170 = vsel %vm158, %v148, %v151
    %v171 = vsel %vm161, %v157, 1326507024
    %v172 = vsel %vm160, %v154, %v171
    %v173 = vsel %vm159, %v170, %v172
    %v174 = vshll.u32 %v134, 8
    %v175 = vmul.u32.u64.compose %v174, %v173
    %v176 = vextract.low.u32 %v175
    %v177 = vextract.high.u32 %v175
    %v178 = vmul.u32.u64.compose %v174, %v169
    %v179 = vextract.low.u32 %v178
    %v180 = vextract.high.u32 %v178
    %v181 = vmul.u32 %v174, %v165
    %v182 = vadd.s32 %v177, %v179
    %vm183 = vc.u32 %v177, %v179
    %v184 = vadd.s32 %v180, 1
    %v185 = vsel %vm183, %v184, %v180
    %v186 = vadd.s32 %v181, %v185
    %v187 = vadd.s32 %v186, 536870912
    %v188 = vshrl.u32 %v187, 30
    %v189 = vshll.u32 %v188, 30
    %v190 = vsub.s32 %v186, %v189
    %vm191 = vcmp.lt.s32.totalorder %v190, 0
    %v192 = vsub.s32 0, %v190
    %v193 = vsel %vm191, %v192, %v190
    %v194 = vclz %v193
    %v195 = vsub.s32 %v194, 2
    %vm196 = vcmp.gt.s32.totalorder 0, %v195
    %v197 = vsel %vm196, 0, %v195
    %v198 = vsub.s32 32, %v197
    %v199 = vshll.u32 %v190, %v197
    %v200 = vshrl.u32 %v182, %v198
    %v201 = vor.u32 %v199, %v200
    %v202 = vsub.s32 4294967266, %v197
    %v203 = vadd.s32 %v202, 127
    %v204 = vshll.u32 %v203, 23
    %v205 = vor.u32 4788187, %v204
    %v206 = vand.u32 2147483647, %v205
    %v208 = vcvt.s32.f32 %v201
    %v209 = vmul.f32 %v208, %v206
    %v210 = vxor.u32 %v209, 2147483648
    %v211 = vsel %vm128, %v210, %v209
    %v212 = vsub.s32 4, %v188
    %v213 = vsel %vm128, %v212, %v188
    %v214 = vsel %vm127, %v22, %v211
    %v215 = vsel %vm127, 0, %v213
    %v216 = vcosq.f32.pop %v214
    %v217 = vsinq.f32.pop %v214
    %vm218 = vweird.f32 %v22
    %v219 = vand.u32 %v215, 3
    %vm220 = vcmp.lt.s32.totalorder %v219, 2
    %vm221 = vcmp.eq.s32.totalorder %v219, 0
    %v222 = vxor.u32 %v217, 2147483648
    %v223 = vsel %vm221, %v216, %v222
    %vm224 = vcmp.eq.s32.totalorder %v219, 2
    %v225 = vxor.u32 %v216, 2147483648
    %v226 = vsel %vm224, %v225, %v217
    %v227 = vsel %vm220, %v223, %v226
    %v228 = vsel %vm218, nan, %v227
    %229 = vst [vmem:[#allocation5] sm:$0xff] %v125
    %230 = vst [vmem:[#allocation5 + $0x8] sm:$0xff] %v228
    // Predicated region
    $region10: #{tpu_custom_call.1} parent=1 // pred_check
      _
    $region11: #{tpu_custom_call.1} parent=1 // pred_check_branch
      %232 = sbr.rel (0) target = $region13
    $region12: #{tpu_custom_call.1} parent=1 // pred_region
      %s234 = ssub.s32 256, 256
      %235 = vsyncadd [#allocation4], %s234
      %s237 = sshll.u32 [#allocation5], 4
      %s238 = int_to_ptr.vmem [resolvable:$true] %s237
      %240 = dma.vmem_to_hbm [thread:$0]  %s238, 256, %s1, [#allocation4]
    $region13: #{tpu_custom_call.1} parent=1 // pred_fallthru
      _
    // Predicated region
    $region14: #{tpu_custom_call.1} parent=1 // pred_check
      _
    $region15: #{tpu_custom_call.1} parent=1 // pred_check_branch
      %242 = sbr.rel (0) target = $region17
    $region16: #{tpu_custom_call.1} parent=1 // pred_region
      %243 = dma.done [#allocation4], 256
    $region17: #{tpu_custom_call.1} parent=1 // pred_fallthru
      _
    %244 = vsyncpa [#allocation3], 1
    %245 = vsyncpa [#allocation4], 1

</llo_original>
